<compile_context>
chip_gen: v5e
topology: v5e:2x2
jax: 0.10.0
libtpu: 0.0.40
codegen_flags: <defaults>
</compile_context>

<pallas_src>
import math
import functools

import jax
import jax.numpy as jnp
from jax.experimental import pallas as pl
from jax.experimental.pallas import tpu as pltpu


# ---------------------------------------------------------------------------
# Fused kernel: context encoder prologue + vocab-tiled bow cross-entropy
# ---------------------------------------------------------------------------
def _decoder_bow_kernel(x_ref, wfc_ref, bfc_ref, gamma_ref, beta_ref,
                        ids_ref, wbow_ref, loss_ref,
                        ctx_sc, m_sc, l_sc, t_sc):
    v_idx = pl.program_id(0)
    n_tiles = pl.num_programs(0)

    # ---- prologue (first vocab tile): fused context encoder + accumulator init
    @pl.when(v_idx == 0)
    def _():
        x = x_ref[...].astype(jnp.float32)                      # (1, 2*In)
        # exact (erf-based) GELU, same as torch.nn.GELU() default
        g = 0.5 * x * (1.0 + jax.lax.erf(x * (1.0 / math.sqrt(2.0))))
        # TODO(synk): nn.Dropout is identity in eval mode; training-mode dropout
        # (stateful PRNG masking) is omitted here.
        y = jnp.dot(g.astype(jnp.bfloat16), wfc_ref[...],
                    preferred_element_type=jnp.float32) + bfc_ref[...]   # (1, H)
        mu = jnp.mean(y, axis=-1, keepdims=True)
        var = jnp.mean((y - mu) * (y - mu), axis=-1, keepdims=True)
        yn = (y - mu) * jax.lax.rsqrt(var + 1e-5)
        ctx_sc[...] = yn * gamma_ref[...] + beta_ref[...]
        m_sc[...] = jnp.full(m_sc.shape, -jnp.inf, m_sc.dtype)
        l_sc[...] = jnp.zeros(l_sc.shape, l_sc.dtype)
        t_sc[...] = jnp.zeros(t_sc.shape, t_sc.dtype)

    # ---- logits for the current vocab tile (bf16 MXU, f32 accumulation)
    logits = jnp.dot(ctx_sc[...].astype(jnp.bfloat16), wbow_ref[...],
                     preferred_element_type=jnp.float32)         # (1, TILE_V)

    # ---- online (flash-style) log-sum-exp over the vocab axis
    tile_max = jnp.max(logits, axis=-1, keepdims=True)           # (1, 1)
    m_old = m_sc[...]
    m_new = jnp.maximum(m_old, tile_max)
    l_sc[...] = l_sc[...] * jnp.exp(m_old - m_new) + \
        jnp.sum(jnp.exp(logits - m_new), axis=-1, keepdims=True)
    m_sc[...] = m_new

    # ---- per-tile target-logit gather (one-hot restricted to (N, TILE_V))
    ids = ids_ref[...]                                           # (N, 1) int32
    n = ids.shape[0]
    tile_v = logits.shape[-1]
    col = jax.lax.broadcasted_iota(jnp.int32, (n, tile_v), 1) + v_idx * tile_v
    valid = ids != -100                                          # (N, 1)
    hit = jnp.logical_and(col == ids, valid)                     # (N, TILE_V)
    t_sc[...] = t_sc[...] + jnp.sum(jnp.where(hit, logits, 0.0),
                                    axis=(0, 1), keepdims=True)

    # ---- epilogue: finalize CrossEntropy(ignore_index=-100)
    @pl.when(v_idx == n_tiles - 1)
    def _():
        nvalid = jnp.sum(valid.astype(jnp.float32), axis=(0, 1), keepdims=True)
        lse = m_sc[...] + jnp.log(l_sc[...])                     # (1, 1)
        # mean over valid targets of (lse - logit[target]);
        # NaN when all targets are -100 (matches torch CrossEntropyLoss).
        loss_ref[...] = (nvalid * lse - t_sc[...]) / nvalid


def _pick_tile_v(vocab_size, target):
    """Largest multiple of 128 <= target that divides vocab_size (or full V)."""
    if vocab_size <= 128 or vocab_size % 128 != 0:
        return vocab_size
    t = max(128, (min(target, vocab_size) // 128) * 128)
    while vocab_size % t != 0:
        t -= 128
    return t


def decoder_bow_loss(x, w_fc, b_fc, gamma, beta, bow_ids, w_bow, *, tile_v=None):
    """x: (1, 2*In) f32, w_fc: (2*In, H) bf16, w_bow: (H, V) bf16,
    bow_ids: (N, 1) int32 -> scalar f32 bow loss."""
    two_in = x.shape[-1]
    hidden = w_fc.shape[1]
    vocab = w_bow.shape[1]
    n_bow = bow_ids.shape[0]

    if tile_v is None:
        # ~8K lanes is a good default on v6e/v7x; cap at 4K for v5e if desired.
        tile_v = _pick_tile_v(vocab, 8192)
    assert vocab % tile_v == 0
    n_tiles = vocab // tile_v

    # VMEM budget: 2x (double-buffered) bf16 w_bow tile + resident small constants.
    tile_bytes = hidden * tile_v * 2
    const_bytes = two_in * hidden * 2 + 6 * hidden * 4 + two_in * 4 + n_bow * 4 + 256
    needed = 2 * tile_bytes + const_bytes + (1 << 20)
    vmem_limit = int(min(needed * 2, 48 << 20)) if needed > (16 << 20) else None

    out = pl.pallas_call(
        _decoder_bow_kernel,
        out_shape=jax.ShapeDtypeStruct((1, 1), jnp.float32),
        grid=(n_tiles,),
        in_specs=[
            pl.BlockSpec((1, two_in), lambda v: (0, 0)),        # x (resident)
            pl.BlockSpec((two_in, hidden), lambda v: (0, 0)),   # w_fc (resident)
            pl.BlockSpec((1, hidden), lambda v: (0, 0)),        # b_fc
            pl.BlockSpec((1, hidden), lambda v: (0, 0)),        # ln gamma
            pl.BlockSpec((1, hidden), lambda v: (0, 0)),        # ln beta
            pl.BlockSpec((n_bow, 1), lambda v: (0, 0)),         # bow ids
            pl.BlockSpec((hidden, tile_v), lambda v: (0, v)),   # w_bow vocab tile
        ],
        out_specs=pl.BlockSpec((1, 1), lambda v: (0, 0)),
        scratch_shapes=[
            pltpu.VMEM((1, hidden), jnp.float32),   # context encoding
            pltpu.VMEM((1, 1), jnp.float32),        # running max
            pltpu.VMEM((1, 1), jnp.float32),        # running sum-exp
            pltpu.VMEM((1, 1), jnp.float32),        # running sum of target logits
        ],
        compiler_params=pltpu.CompilerParams(
            dimension_semantics=("arbitrary",),      # vocab axis is a reduction
            vmem_limit_bytes=vmem_limit,
        ),
    )(x, w_fc, b_fc, gamma, beta, bow_ids, w_bow)
    return out[0, 0]


# ---------------------------------------------------------------------------
# Decoder forward (dec_type > 0, use_bow_loss=True path)
# ---------------------------------------------------------------------------
@functools.partial(jax.jit, static_argnames=("tile_v",))
def decoder_forward(params, context_enc, context_pred, bow_ids, a3, *, tile_v=None):
    # cat along feature axis, as a (1, 2*In) row vector
    x = jnp.concatenate([context_enc, context_pred], axis=-1)[None, :]
    bloss = decoder_bow_loss(x, params["w_fc"], params["b_fc"],
                             params["ln_gamma"], params["ln_beta"],
                             bow_ids, params["w_bow"], tile_v=tile_v)

    # TODO(synk): lm_loss comes from a pretrained GPT2LMHeadModel; no Pallas
    # equivalent here, so lm_loss = 0.0.
    lm_loss = jnp.float32(0.0)
    loss = lm_loss + a3 * bloss
    return loss, lm_loss, bloss


# ---------------------------------------------------------------------------
# Parameter init (deterministic, shapes from Decoder.__init__)
# Weights are stored in bf16 (halves HBM traffic); biases / LN params in f32.
# ---------------------------------------------------------------------------
def init_params(key, input_size, hidden_size, vocab_size):
    k1, k2, k3 = jax.random.split(key, 3)
    fan_in = 2 * input_size
    bound = 1.0 / math.sqrt(fan_in)
    params = {
        # context_enc_fc: Linear(2*input_size, hidden_size) — stored as (in, out)
        "w_fc": jax.random.uniform(k1, (2 * input_size, hidden_size),
                                   jnp.float32, -bound, bound).astype(jnp.bfloat16),
        "b_fc": jax.random.uniform(k2, (1, hidden_size),
                                   jnp.float32, -bound, bound),
        # context_enc_ln: LayerNorm(hidden_size)
        "ln_gamma": jnp.ones((1, hidden_size), jnp.float32),
        "ln_beta": jnp.zeros((1, hidden_size), jnp.float32),
        # bow_head: Linear(hidden_size, vocab_size, bias=False) — stored as (in, out)
        "w_bow": jax.random.uniform(k3, (hidden_size, vocab_size), jnp.float32,
                                    -1.0 / math.sqrt(hidden_size),
                                    1.0 / math.sqrt(hidden_size)).astype(jnp.bfloat16),
    }
    return params


if __name__ == "__main__":
    input_size = 16
    hidden_size = 32
    vocab_size = 512       # multiple of 128 so the vocab grid has 4 tiles
    n_bow = 8
    a3 = jnp.float32(0.5)

    key = jax.random.PRNGKey(0)
    kp, kce, kcp, kids = jax.random.split(key, 4)

    params = init_params(kp, input_size, hidden_size, vocab_size)

    context_enc = jax.random.normal(kce, (input_size,), jnp.float32)
    context_pred = jax.random.normal(kcp, (input_size,), jnp.float32)
    bow_ids = jax.random.randint(kids, (n_bow, 1), 0, vocab_size, jnp.int32)
    # include one ignored target to exercise ignore_index=-100 semantics
    bow_ids = bow_ids.at[-1, 0].set(-100)

    # tile_v=128 at this toy vocab size so the online-LSE grid actually iterates
    loss, lm_loss, b_loss = decoder_forward(params, context_enc, context_pred,
                                            bow_ids, a3, tile_v=128)
    jax.block_until_ready((loss, lm_loss, b_loss))

    loss_dict = {"loss": float(loss), "lm": float(lm_loss), "bow": float(b_loss)}
    print("KERNEL_OK")
</pallas_src>

<mosaic_0001>
module attributes {stable_mosaic.version = 11 : i64} {
  func.func @_decoder_bow_kernel(%arg0: i32, %arg1: memref<1x32xf32, #tpu.memory_space<vmem>>, %arg2: memref<32x32xbf16, #tpu.memory_space<vmem>>, %arg3: memref<1x32xf32, #tpu.memory_space<vmem>>, %arg4: memref<1x32xf32, #tpu.memory_space<vmem>>, %arg5: memref<1x32xf32, #tpu.memory_space<vmem>>, %arg6: memref<8x1xi32, #tpu.memory_space<vmem>>, %arg7: memref<32x128xbf16, #tpu.memory_space<vmem>>, %arg8: memref<1x1xf32, #tpu.memory_space<vmem>>, %arg9: memref<1x32xf32, #tpu.memory_space<vmem>>, %arg10: memref<1x1xf32, #tpu.memory_space<vmem>>, %arg11: memref<1x1xf32, #tpu.memory_space<vmem>>, %arg12: memref<1x1xf32, #tpu.memory_space<vmem>>) attributes {dimension_semantics = [#tpu.dimension_semantics<arbitrary>], iteration_bounds = array<i64: 4>, scalar_prefetch = 0 : i64, scratch_operands = 4 : i64, tpu.core_type = #tpu.core_type<tc>, window_params = [{pipeline_mode = #tpu.pipeline_mode<synchronous>, transform_indices = @transform_0, window_bounds = array<i64: 1, 32>}, {pipeline_mode = #tpu.pipeline_mode<synchronous>, transform_indices = @transform_1, window_bounds = array<i64: 32, 32>}, {pipeline_mode = #tpu.pipeline_mode<synchronous>, transform_indices = @transform_2, window_bounds = array<i64: 1, 32>}, {pipeline_mode = #tpu.pipeline_mode<synchronous>, transform_indices = @transform_3, window_bounds = array<i64: 1, 32>}, {pipeline_mode = #tpu.pipeline_mode<synchronous>, transform_indices = @transform_4, window_bounds = array<i64: 1, 32>}, {pipeline_mode = #tpu.pipeline_mode<synchronous>, transform_indices = @transform_5, window_bounds = array<i64: 8, 1>}, {transform_indices = @transform_6, window_bounds = array<i64: 32, 128>}, {pipeline_mode = #tpu.pipeline_mode<synchronous>, transform_indices = @transform_7, window_bounds = array<i64: 1, 1>}]} {
    %c0_i32 = arith.constant 0 : i32
    %0 = arith.cmpi eq, %arg0, %c0_i32 : i32
    %1 = arith.extui %0 : i1 to i32
    %c0_i32_0 = arith.constant 0 : i32
    %2 = arith.cmpi ne, %1, %c0_i32_0 : i32
    scf.if %2 {
      %c0_23 = arith.constant 0 : index
      %c0_24 = arith.constant 0 : index
      %49 = vector.load %arg1[%c0_23, %c0_24] : memref<1x32xf32, #tpu.memory_space<vmem>>, vector<1x32xf32>
      %cst_25 = arith.constant 5.000000e-01 : f32
      %50 = vector.broadcast %cst_25 : f32 to vector<1x32xf32>
      %51 = arith.mulf %50, %49 : vector<1x32xf32>
      %cst_26 = arith.constant 0.707106769 : f32
      %52 = vector.broadcast %cst_26 : f32 to vector<1x32xf32>
      %53 = arith.mulf %49, %52 : vector<1x32xf32>
      %54 = math.erf %53 : vector<1x32xf32>
      %cst_27 = arith.constant 1.000000e+00 : f32
      %55 = vector.broadcast %cst_27 : f32 to vector<1x32xf32>
      %56 = arith.addf %55, %54 : vector<1x32xf32>
      %57 = arith.mulf %51, %56 : vector<1x32xf32>
      %58 = arith.truncf %57 : vector<1x32xf32> to vector<1x32xbf16>
      %c0_28 = arith.constant 0 : index
      %c0_29 = arith.constant 0 : index
      %59 = vector.load %arg2[%c0_28, %c0_29] : memref<32x32xbf16, #tpu.memory_space<vmem>>, vector<32x32xbf16>
      %cst_30 = arith.constant dense<0.000000e+00> : vector<1x32xf32>
      %60 = tpu.matmul %58, %59, %cst_30 {dimension_numbers = #tpu.dot_dimension_numbers<[1], [0], [0], [1], [0, 0, 1, 1], [], []>} : vector<1x32xbf16>, vector<32x32xbf16>, vector<1x32xf32> -> vector<1x32xf32>
      %c0_31 = arith.constant 0 : index
      %c0_32 = arith.constant 0 : index
      %61 = vector.load %arg3[%c0_31, %c0_32] : memref<1x32xf32, #tpu.memory_space<vmem>>, vector<1x32xf32>
      %62 = arith.addf %60, %61 : vector<1x32xf32>
      %cst_33 = arith.constant dense<0.000000e+00> : vector<1xf32>
      %63 = vector.multi_reduction <add>, %62, %cst_33 [1] : vector<1x32xf32> to vector<1xf32>
      %64 = vector.shape_cast %63 : vector<1xf32> to vector<1x1xf32>
      %cst_34 = arith.constant 3.200000e+01 : f32
      %65 = vector.broadcast %cst_34 : f32 to vector<1x1xf32>
      %66 = arith.divf %64, %65 : vector<1x1xf32>
      %67 = vector.broadcast %66 : vector<1x1xf32> to vector<1x32xf32>
      %68 = arith.subf %62, %67 : vector<1x32xf32>
      %69 = vector.broadcast %66 : vector<1x1xf32> to vector<1x32xf32>
      %70 = arith.subf %62, %69 : vector<1x32xf32>
      %71 = arith.mulf %68, %70 : vector<1x32xf32>
      %cst_35 = arith.constant dense<0.000000e+00> : vector<1xf32>
      %72 = vector.multi_reduction <add>, %71, %cst_35 [1] : vector<1x32xf32> to vector<1xf32>
      %73 = vector.shape_cast %72 : vector<1xf32> to vector<1x1xf32>
      %cst_36 = arith.constant 3.200000e+01 : f32
      %74 = vector.broadcast %cst_36 : f32 to vector<1x1xf32>
      %75 = arith.divf %73, %74 : vector<1x1xf32>
      %76 = vector.broadcast %66 : vector<1x1xf32> to vector<1x32xf32>
      %77 = arith.subf %62, %76 : vector<1x32xf32>
      %cst_37 = arith.constant 9.99999974E-6 : f32
      %78 = vector.broadcast %cst_37 : f32 to vector<1x1xf32>
      %79 = arith.addf %75, %78 : vector<1x1xf32>
      %80 = math.rsqrt %79 : vector<1x1xf32>
      %81 = vector.broadcast %80 : vector<1x1xf32> to vector<1x32xf32>
      %82 = arith.mulf %77, %81 : vector<1x32xf32>
      %c0_38 = arith.constant 0 : index
      %c0_39 = arith.constant 0 : index
      %83 = vector.load %arg4[%c0_38, %c0_39] : memref<1x32xf32, #tpu.memory_space<vmem>>, vector<1x32xf32>
      %84 = arith.mulf %82, %83 : vector<1x32xf32>
      %c0_40 = arith.constant 0 : index
      %c0_41 = arith.constant 0 : index
      %85 = vector.load %arg5[%c0_40, %c0_41] : memref<1x32xf32, #tpu.memory_space<vmem>>, vector<1x32xf32>
      %86 = arith.addf %84, %85 : vector<1x32xf32>
      %c0_42 = arith.constant 0 : index
      %c0_43 = arith.constant 0 : index
      %87 = vector.load %arg9[%c0_42, %c0_43] : memref<1x32xf32, #tpu.memory_space<vmem>>, vector<1x32xf32>
      tpu.vector_store %arg9[%c0_42, %c0_43], %86 {strides = array<i32>} : memref<1x32xf32, #tpu.memory_space<vmem>>, vector<1x32xf32>,
      %cst_44 = arith.constant 0xFF800000 : f32
      %88 = vector.broadcast %cst_44 : f32 to vector<1x1xf32>
      %c0_45 = arith.constant 0 : index
      %c0_46 = arith.constant 0 : index
      %89 = vector.load %arg10[%c0_45, %c0_46] : memref<1x1xf32, #tpu.memory_space<vmem>>, vector<1x1xf32>
      tpu.vector_store %arg10[%c0_45, %c0_46], %88 {strides = array<i32>} : memref<1x1xf32, #tpu.memory_space<vmem>>, vector<1x1xf32>,
      %cst_47 = arith.constant 0.000000e+00 : f32
      %90 = vector.broadcast %cst_47 : f32 to vector<1x1xf32>
      %c0_48 = arith.constant 0 : index
      %c0_49 = arith.constant 0 : index
      %91 = vector.load %arg11[%c0_48, %c0_49] : memref<1x1xf32, #tpu.memory_space<vmem>>, vector<1x1xf32>
      tpu.vector_store %arg11[%c0_48, %c0_49], %90 {strides = array<i32>} : memref<1x1xf32, #tpu.memory_space<vmem>>, vector<1x1xf32>,
      %cst_50 = arith.constant 0.000000e+00 : f32
      %92 = vector.broadcast %cst_50 : f32 to vector<1x1xf32>
      %c0_51 = arith.constant 0 : index
      %c0_52 = arith.constant 0 : index
      %93 = vector.load %arg12[%c0_51, %c0_52] : memref<1x1xf32, #tpu.memory_space<vmem>>, vector<1x1xf32>
      tpu.vector_store %arg12[%c0_51, %c0_52], %92 {strides = array<i32>} : memref<1x1xf32, #tpu.memory_space<vmem>>, vector<1x1xf32>,
    } else {
    }
    %c0 = arith.constant 0 : index
    %c0_1 = arith.constant 0 : index
    %3 = vector.load %arg9[%c0, %c0_1] : memref<1x32xf32, #tpu.memory_space<vmem>>, vector<1x32xf32>
    %4 = arith.truncf %3 : vector<1x32xf32> to vector<1x32xbf16>
    %c0_2 = arith.constant 0 : index
    %c0_3 = arith.constant 0 : index
    %5 = vector.load %arg7[%c0_2, %c0_3] : memref<32x128xbf16, #tpu.memory_space<vmem>>, vector<32x128xbf16>
    %cst = arith.constant dense<0.000000e+00> : vector<1x128xf32>
    %6 = tpu.matmul %4, %5, %cst {dimension_numbers = #tpu.dot_dimension_numbers<[1], [0], [0], [1], [0, 0, 1, 1], [], []>} : vector<1x32xbf16>, vector<32x128xbf16>, vector<1x128xf32> -> vector<1x128xf32>
    %cst_4 = arith.constant dense<0xFF800000> : vector<1xf32>
    %7 = vector.multi_reduction <maximumf>, %6, %cst_4 [1] : vector<1x128xf32> to vector<1xf32>
    %8 = vector.shape_cast %7 : vector<1xf32> to vector<1x1xf32>
    %c0_5 = arith.constant 0 : index
    %c0_6 = arith.constant 0 : index
    %9 = vector.load %arg10[%c0_5, %c0_6] : memref<1x1xf32, #tpu.memory_space<vmem>>, vector<1x1xf32>
    %10 = arith.maximumf %9, %8 : vector<1x1xf32>
    %c0_7 = arith.constant 0 : index
    %c0_8 = arith.constant 0 : index
    %11 = vector.load %arg11[%c0_7, %c0_8] : memref<1x1xf32, #tpu.memory_space<vmem>>, vector<1x1xf32>
    %12 = arith.subf %9, %10 : vector<1x1xf32>
    %13 = math.exp %12 : vector<1x1xf32>
    %14 = arith.mulf %11, %13 : vector<1x1xf32>
    %15 = vector.broadcast %10 : vector<1x1xf32> to vector<1x128xf32>
    %16 = arith.subf %6, %15 : vector<1x128xf32>
    %17 = math.exp %16 : vector<1x128xf32>
    %cst_9 = arith.constant dense<0.000000e+00> : vector<1xf32>
    %18 = vector.multi_reduction <add>, %17, %cst_9 [1] : vector<1x128xf32> to vector<1xf32>
    %19 = vector.shape_cast %18 : vector<1xf32> to vector<1x1xf32>
    %20 = arith.addf %14, %19 : vector<1x1xf32>
    %c0_10 = arith.constant 0 : index
    %c0_11 = arith.constant 0 : index
    %21 = vector.load %arg11[%c0_10, %c0_11] : memref<1x1xf32, #tpu.memory_space<vmem>>, vector<1x1xf32>
    tpu.vector_store %arg11[%c0_10, %c0_11], %20 {strides = array<i32>} : memref<1x1xf32, #tpu.memory_space<vmem>>, vector<1x1xf32>,
    %c0_12 = arith.constant 0 : index
    %c0_13 = arith.constant 0 : index
    %22 = vector.load %arg10[%c0_12, %c0_13] : memref<1x1xf32, #tpu.memory_space<vmem>>, vector<1x1xf32>
    tpu.vector_store %arg10[%c0_12, %c0_13], %10 {strides = array<i32>} : memref<1x1xf32, #tpu.memory_space<vmem>>, vector<1x1xf32>,
    %c0_14 = arith.constant 0 : index
    %c0_15 = arith.constant 0 : index
    %23 = vector.load %arg6[%c0_14, %c0_15] : memref<8x1xi32, #tpu.memory_space<vmem>>, vector<8x1xi32>
    %24 = tpu.iota {dimensions = array<i32: 1>} : vector<8x128xi32>
    %c128_i32 = arith.constant 128 : i32
    %25 = arith.muli %arg0, %c128_i32 : i32
    %26 = vector.broadcast %25 : i32 to vector<8x128xi32>
    %27 = arith.addi %24, %26 : vector<8x128xi32>
    %c-100_i32 = arith.constant -100 : i32
    %28 = vector.broadcast %c-100_i32 : i32 to vector<8x1xi32>
    %29 = arith.cmpi ne, %23, %28 : vector<8x1xi32>
    %30 = vector.broadcast %23 : vector<8x1xi32> to vector<8x128xi32>
    %31 = arith.cmpi eq, %27, %30 : vector<8x128xi32>
    %32 = vector.broadcast %29 : vector<8x1xi1> to vector<8x128xi1>
    %33 = arith.andi %31, %32 : vector<8x128xi1>
    %c0_16 = arith.constant 0 : index
    %c0_17 = arith.constant 0 : index
    %34 = vector.load %arg12[%c0_16, %c0_17] : memref<1x1xf32, #tpu.memory_space<vmem>>, vector<1x1xf32>
    %cst_18 = arith.constant 0.000000e+00 : f32
    %35 = vector.shape_cast %6 : vector<1x128xf32> to vector<1x128xf32>
    %36 = vector.broadcast %35 : vector<1x128xf32> to vector<8x128xf32>
    %37 = vector.broadcast %cst_18 : f32 to vector<8x128xf32>
    %38 = arith.select %33, %36, %37 : vector<8x128xi1>, vector<8x128xf32>
    %39 = vector.shape_cast %38 : vector<8x128xf32> to vector<1x8x128xf32>
    %cst_19 = arith.constant dense<0.000000e+00> : vector<1xf32>
    %40 = vector.multi_reduction <add>, %39, %cst_19 [1, 2] : vector<1x8x128xf32> to vector<1xf32>
    %41 = vector.shape_cast %40 : vector<1xf32> to vector<1x1x1xf32>
    %42 = vector.extract %41[0, 0, 0] : f32 from vector<1x1x1xf32>
    %43 = vector.broadcast %42 : f32 to vector<1x1xf32>
    %44 = arith.addf %34, %43 : vector<1x1xf32>
    %c0_20 = arith.constant 0 : index
    %c0_21 = arith.constant 0 : index
    %45 = vector.load %arg12[%c0_20, %c0_21] : memref<1x1xf32, #tpu.memory_space<vmem>>, vector<1x1xf32>
    tpu.vector_store %arg12[%c0_20, %c0_21], %44 {strides = array<i32>} : memref<1x1xf32, #tpu.memory_space<vmem>>, vector<1x1xf32>,
    %c3_i32 = arith.constant 3 : i32
    %46 = arith.cmpi eq, %arg0, %c3_i32 : i32
    %47 = arith.extui %46 : i1 to i32
    %c0_i32_22 = arith.constant 0 : i32
    %48 = arith.cmpi ne, %47, %c0_i32_22 : i32
    scf.if %48 {
      %49 = arith.extui %29 : vector<8x1xi1> to vector<8x1xi32>
      %50 = arith.sitofp %49 : vector<8x1xi32> to vector<8x1xf32>
      %51 = vector.shape_cast %50 : vector<8x1xf32> to vector<1x8x1xf32>
      %cst_23 = arith.constant dense<0.000000e+00> : vector<1xf32>
      %52 = vector.multi_reduction <add>, %51, %cst_23 [1, 2] : vector<1x8x1xf32> to vector<1xf32>
      %53 = vector.shape_cast %52 : vector<1xf32> to vector<1x1x1xf32>
      %54 = vector.extract %53[0, 0, 0] : f32 from vector<1x1x1xf32>
      %55 = vector.broadcast %54 : f32 to vector<1x1xf32>
      %c0_24 = arith.constant 0 : index
      %c0_25 = arith.constant 0 : index
      %56 = vector.load %arg10[%c0_24, %c0_25] : memref<1x1xf32, #tpu.memory_space<vmem>>, vector<1x1xf32>
      %c0_26 = arith.constant 0 : index
      %c0_27 = arith.constant 0 : index
      %57 = vector.load %arg11[%c0_26, %c0_27] : memref<1x1xf32, #tpu.memory_space<vmem>>, vector<1x1xf32>
      %58 = math.log %57 : vector<1x1xf32>
      %59 = arith.addf %56, %58 : vector<1x1xf32>
      %60 = arith.mulf %55, %59 : vector<1x1xf32>
      %c0_28 = arith.constant 0 : index
      %c0_29 = arith.constant 0 : index
      %61 = vector.load %arg12[%c0_28, %c0_29] : memref<1x1xf32, #tpu.memory_space<vmem>>, vector<1x1xf32>
      %62 = arith.subf %60, %61 : vector<1x1xf32>
      %63 = arith.divf %62, %55 : vector<1x1xf32>
      %c0_30 = arith.constant 0 : index
      %c0_31 = arith.constant 0 : index
      %64 = vector.load %arg8[%c0_30, %c0_31] : memref<1x1xf32, #tpu.memory_space<vmem>>, vector<1x1xf32>
      tpu.vector_store %arg8[%c0_30, %c0_31], %63 {strides = array<i32>} : memref<1x1xf32, #tpu.memory_space<vmem>>, vector<1x1xf32>,
    } else {
    }
    return
  }
  func.func @transform_0(%arg0: i32) -> (i32, i32) {
    %c0_i32 = arith.constant 0 : i32
    %c0_i32_0 = arith.constant 0 : i32
    %c0_i32_1 = arith.constant 0 : i32
    return %c0_i32, %c0_i32_0 : i32, i32
  }
  func.func @transform_1(%arg0: i32) -> (i32, i32) {
    %c0_i32 = arith.constant 0 : i32
    %c0_i32_0 = arith.constant 0 : i32
    %c0_i32_1 = arith.constant 0 : i32
    return %c0_i32, %c0_i32_0 : i32, i32
  }
  func.func @transform_2(%arg0: i32) -> (i32, i32) {
    %c0_i32 = arith.constant 0 : i32
    %c0_i32_0 = arith.constant 0 : i32
    %c0_i32_1 = arith.constant 0 : i32
    return %c0_i32, %c0_i32_0 : i32, i32
  }
  func.func @transform_3(%arg0: i32) -> (i32, i32) {
    %c0_i32 = arith.constant 0 : i32
    %c0_i32_0 = arith.constant 0 : i32
    %c0_i32_1 = arith.constant 0 : i32
    return %c0_i32, %c0_i32_0 : i32, i32
  }
  func.func @transform_4(%arg0: i32) -> (i32, i32) {
    %c0_i32 = arith.constant 0 : i32
    %c0_i32_0 = arith.constant 0 : i32
    %c0_i32_1 = arith.constant 0 : i32
    return %c0_i32, %c0_i32_0 : i32, i32
  }
  func.func @transform_5(%arg0: i32) -> (i32, i32) {
    %c0_i32 = arith.constant 0 : i32
    %c0_i32_0 = arith.constant 0 : i32
    %c0_i32_1 = arith.constant 0 : i32
    return %c0_i32, %c0_i32_0 : i32, i32
  }
  func.func @transform_6(%arg0: i32) -> (i32, i32) {
    %c0_i32 = arith.constant 0 : i32
    %c0_i32_0 = arith.constant 0 : i32
    return %c0_i32, %arg0 : i32, i32
  }
  func.func @transform_7(%arg0: i32) -> (i32, i32) {
    %c0_i32 = arith.constant 0 : i32
    %c0_i32_0 = arith.constant 0 : i32
    %c0_i32_1 = arith.constant 0 : i32
    return %c0_i32, %c0_i32_0 : i32, i32
  }
}

</mosaic_0001>

<llo_original>
// kernel: decoder_forward.1
$region0: #{decoder_forward.1}
  #allocation0 [shape = 'u32[]', space=smem, size = 0x4, offset = 0x4, fixed_abs, tag = 'smem constant byte address 0x4 - core index']
  #allocation1 [shape = 'u32[72,128]{1,0:T(1,128)}', space=vmem, size = 0x9000, scoped, tag = 'internal scratch']
  #allocation2 [shape = 'f32[1,32]{1,0:T(1,128)}', space=vmem, size = 0x200, scoped, tag = 'scratch operand']
  #allocation3 [shape = 'f32[1,1]{1,0:T(1,128)}', space=vmem, size = 0x200, scoped, tag = 'scratch operand']
  #allocation4 [shape = 'f32[1,1]{1,0:T(1,128)}', space=vmem, size = 0x200, scoped, tag = 'scratch operand']
  #allocation5 [shape = 'f32[1,1]{1,0:T(1,128)}', space=vmem, size = 0x200, scoped, tag = 'scratch operand']
  %s0 = inlined_call_operand.vmem [shape: f32[1,32], index: 0, kind: input, shape index: {}]
  %s1 = inlined_call_operand.hbm [shape: bf16[32,32], index: 1, kind: input, shape index: {}]
  %s2 = inlined_call_operand.vmem [shape: f32[1,32], index: 2, kind: input, shape index: {}]
  %s3 = inlined_call_operand.vmem [shape: f32[1,32], index: 3, kind: input, shape index: {}]
  %s4 = inlined_call_operand.vmem [shape: f32[1,32], index: 4, kind: input, shape index: {}]
  %s5 = inlined_call_operand.vmem [shape: s32[8,1], index: 5, kind: input, shape index: {}]
  %s6 = inlined_call_operand.hbm [shape: bf16[32,512], index: 6, kind: input, shape index: {}]
  %s7 = inlined_call_operand.hbm [shape: f32[1,1], index: 7, kind: output, shape index: {}]
  %s8 = sld [smem:[#allocation0]]
  $region77: #{decoder_forward.1} parent=0
    _
  %s10 = ssub.s32 1, %s8
  %s11 = scalar_select 0, %s10, %s8
  $region1: #{decoder_forward.1} parent=0
    #allocation6 [shape = 'u8[8192]{0}', space=vmem, size = 0x2000, scoped, tag = 'input window, operand 1, single buffered']
    #allocation7 [shape = 's32[2]{0}', space=sflag, size = 0x8, scoped, tag = 'scoped memory for decoder_forward.1']
    #allocation8 [shape = 's32[2]{0}', space=sflag, size = 0x8, scoped, tag = 'scoped memory for decoder_forward.1']
    #allocation9 [shape = 'u8[16384]{0}', space=vmem, size = 0x4000, scoped, tag = 'input window, operand 6']
    #allocation10 [shape = 's32[2]{0}', space=sflag, size = 0x8, scoped, tag = 'scoped memory for decoder_forward.1']
    #allocation11 [shape = 'u8[512]{0}', space=vmem, size = 0x400, scoped, tag = 'output window, operand 0, single buffered']
    %12 = vsyncpa [#allocation7], 0
    %13 = vsyncpa [#allocation10], 0
    %s14 = scalar_lea.sflag [#allocation10], 1
    %15 = vsyncpa %s14, 0
    %16 = vsyncpa [#allocation8], 0
    loop: start=0, step=1, limit=6
    $region2: #{decoder_forward.1} parent=1 // loop_pre_header
      _
    $region3: #{decoder_forward.1} parent=1 // loop_header
      %s18 = sphi 0, %s22
      %p19 = scmp.ge.s32.totalorder %s18, 6
      %s26 = sphi 0, %s26
      %s28 = sphi 0, %s26
      %s29 = sphi 0, %s28
      %s43 = sphi 0, %s29
      %s47 = sphi 0, %s47
      %s49 = sphi 0, %s47
      %s50 = sphi 0, %s49
      %s64 = sphi 0, %s50
      %s68 = sphi 0, %s68
      %s70 = sphi 0, %s68
      %s71 = sphi 0, %s70
      %s85 = sphi 0, %s71
      %s89 = sphi 0, %s89
      %s91 = sphi 0, %s89
      %s92 = sphi 0, %s91
      %s106 = sphi 0, %s92
      %s110 = sphi 0, %s110
      %s112 = sphi 0, %s110
      %s113 = sphi 0, %s112
      %s127 = sphi 0, %s113
      %s131 = sphi 0, %s131
      %s133 = sphi 0, %s131
      %s134 = sphi 0, %s133
      %s148 = sphi 0, %s134
      %s154 = sphi 0, %s156
      %s157 = sphi 0, %s154
      %s158 = sphi 0, %s157
      %s174 = sphi 0, %s158
      %s178 = sphi 0, %s178
      %s180 = sphi 0, %s178
      %s181 = sphi 0, %s180
      %s195 = sphi 0, %s181
    $region4: #{decoder_forward.1} parent=1 // loop_header_branch
      %21 = sbr.rel (%p19) target = $region8
    $region5: #{decoder_forward.1} parent=1 // loop_body
      %s23 = ssub.s32 %s18, 1
      %s24 = ssub.s32 %s18, 2
      %s25 = sadd.s32 %s18, 1
      %s27 = sadd.s32 %s26, 1
      %p30 = scmp.eq.s32.totalorder %s18, 3
      %p31 = scmp.ne.s32.totalorder %s26, %s28
      %p32 = scmp.eq.s32.totalorder %s18, 0
      %p33 = por %p31, %p32
      %p34 = scmp.ne.s32.totalorder %s26, %s28
      %p35 = scmp.eq.s32.totalorder %s23, 3
      %p36 = por %p34, %p35
      %p37 = scmp.ne.s32.totalorder %s28, %s29
      %p38 = scmp.eq.s32.totalorder %s23, 0
      %p39 = por %p37, %p38
      %p40 = scmp.ne.s32.totalorder %s28, %s29
      %p41 = scmp.eq.s32.totalorder %s24, 3
      %p42 = por %p40, %p41
      %p44 = scmp.ne.s32.totalorder %s29, %s43
      %p45 = scmp.eq.s32.totalorder %s24, 0
      %p46 = por %p44, %p45
      %s48 = sadd.s32 %s47, 1
      %p51 = scmp.eq.s32.totalorder %s18, 3
      %p52 = scmp.ne.s32.totalorder %s47, %s49
      %p53 = scmp.eq.s32.totalorder %s18, 0
      %p54 = por %p52, %p53
      %p55 = scmp.ne.s32.totalorder %s47, %s49
      %p56 = scmp.eq.s32.totalorder %s23, 3
      %p57 = por %p55, %p56
      %p58 = scmp.ne.s32.totalorder %s49, %s50
      %p59 = scmp.eq.s32.totalorder %s23, 0
      %p60 = por %p58, %p59
      %p61 = scmp.ne.s32.totalorder %s49, %s50
      %p62 = scmp.eq.s32.totalorder %s24, 3
      %p63 = por %p61, %p62
      %p65 = scmp.ne.s32.totalorder %s50, %s64
      %p66 = scmp.eq.s32.totalorder %s24, 0
      %p67 = por %p65, %p66
      %s69 = sadd.s32 %s68, 1
      %p72 = scmp.eq.s32.totalorder %s18, 3
      %p73 = scmp.ne.s32.totalorder %s68, %s70
      %p74 = scmp.eq.s32.totalorder %s18, 0
      %p75 = por %p73, %p74
      %p76 = scmp.ne.s32.totalorder %s68, %s70
      %p77 = scmp.eq.s32.totalorder %s23, 3
      %p78 = por %p76, %p77
      %p79 = scmp.ne.s32.totalorder %s70, %s71
      %p80 = scmp.eq.s32.totalorder %s23, 0
      %p81 = por %p79, %p80
      %p82 = scmp.ne.s32.totalorder %s70, %s71
      %p83 = scmp.eq.s32.totalorder %s24, 3
      %p84 = por %p82, %p83
      %p86 = scmp.ne.s32.totalorder %s71, %s85
      %p87 = scmp.eq.s32.totalorder %s24, 0
      %p88 = por %p86, %p87
      %s90 = sadd.s32 %s89, 1
      %p93 = scmp.eq.s32.totalorder %s18, 3
      %p94 = scmp.ne.s32.totalorder %s89, %s91
      %p95 = scmp.eq.s32.totalorder %s18, 0
      %p96 = por %p94, %p95
      %p97 = scmp.ne.s32.totalorder %s89, %s91
      %p98 = scmp.eq.s32.totalorder %s23, 3
      %p99 = por %p97, %p98
      %p100 = scmp.ne.s32.totalorder %s91, %s92
      %p101 = scmp.eq.s32.totalorder %s23, 0
      %p102 = por %p100, %p101
      %p103 = scmp.ne.s32.totalorder %s91, %s92
      %p104 = scmp.eq.s32.totalorder %s24, 3
      %p105 = por %p103, %p104
      %p107 = scmp.ne.s32.totalorder %s92, %s106
      %p108 = scmp.eq.s32.totalorder %s24, 0
      %p109 = por %p107, %p108
      %s111 = sadd.s32 %s110, 1
      %p114 = scmp.eq.s32.totalorder %s18, 3
      %p115 = scmp.ne.s32.totalorder %s110, %s112
      %p116 = scmp.eq.s32.totalorder %s18, 0
      %p117 = por %p115, %p116
      %p118 = scmp.ne.s32.totalorder %s110, %s112
      %p119 = scmp.eq.s32.totalorder %s23, 3
      %p120 = por %p118, %p119
      %p121 = scmp.ne.s32.totalorder %s112, %s113
      %p122 = scmp.eq.s32.totalorder %s23, 0
      %p123 = por %p121, %p122
      %p124 = scmp.ne.s32.totalorder %s112, %s113
      %p125 = scmp.eq.s32.totalorder %s24, 3
      %p126 = por %p124, %p125
      %p128 = scmp.ne.s32.totalorder %s113, %s127
      %p129 = scmp.eq.s32.totalorder %s24, 0
      %p130 = por %p128, %p129
      %s132 = sadd.s32 %s131, 1
      %p135 = scmp.eq.s32.totalorder %s18, 3
      %p136 = scmp.ne.s32.totalorder %s131, %s133
      %p137 = scmp.eq.s32.totalorder %s18, 0
      %p138 = por %p136, %p137
      %p139 = scmp.ne.s32.totalorder %s131, %s133
      %p140 = scmp.eq.s32.totalorder %s23, 3
      %p141 = por %p139, %p140
      %p142 = scmp.ne.s32.totalorder %s133, %s134
      %p143 = scmp.eq.s32.totalorder %s23, 0
      %p144 = por %p142, %p143
      %p145 = scmp.ne.s32.totalorder %s133, %s134
      %p146 = scmp.eq.s32.totalorder %s24, 3
      %p147 = por %p145, %p146
      %p149 = scmp.ne.s32.totalorder %s134, %s148
      %p150 = scmp.eq.s32.totalorder %s24, 0
      %p151 = por %p149, %p150
      %s152 = ssub.s32 %s18, %s25
      %p153 = scmp.eq.s32.totalorder %s152, 0
      %s155 = sadd.s32 %s154, 1
      %s156 = scalar_select %p153, %s154, %s155
      %p159 = pneg %p153
      %p160 = scmp.eq.s32.totalorder %s18, 3
      %p161 = por %p159, %p160
      %p162 = scmp.ne.s32.totalorder %s154, %s157
      %p163 = scmp.eq.s32.totalorder %s18, 0
      %p164 = por %p162, %p163
      %p165 = scmp.ne.s32.totalorder %s154, %s157
      %p166 = scmp.eq.s32.totalorder %s23, 3
      %p167 = por %p165, %p166
      %p168 = scmp.ne.s32.totalorder %s157, %s158
      %p169 = scmp.eq.s32.totalorder %s23, 0
      %p170 = por %p168, %p169
      %p171 = scmp.ne.s32.totalorder %s157, %s158
      %p172 = scmp.eq.s32.totalorder %s24, 3
      %p173 = por %p171, %p172
      %p175 = scmp.ne.s32.totalorder %s158, %s174
      %p176 = scmp.eq.s32.totalorder %s24, 0
      %p177 = por %p175, %p176
      %s179 = sadd.s32 %s178, 1
      %p182 = scmp.eq.s32.totalorder %s18, 3
      %p183 = scmp.ne.s32.totalorder %s178, %s180
      %p184 = scmp.eq.s32.totalorder %s18, 0
      %p185 = por %p183, %p184
      %p186 = scmp.ne.s32.totalorder %s178, %s180
      %p187 = scmp.eq.s32.totalorder %s23, 3
      %p188 = por %p186, %p187
      %p189 = scmp.ne.s32.totalorder %s180, %s181
      %p190 = scmp.eq.s32.totalorder %s23, 0
      %p191 = por %p189, %p190
      %p192 = scmp.ne.s32.totalorder %s180, %s181
      %p193 = scmp.eq.s32.totalorder %s24, 3
      %p194 = por %p192, %p193
      %p196 = scmp.ne.s32.totalorder %s181, %s195
      %p197 = scmp.eq.s32.totalorder %s24, 0
      %p198 = por %p196, %p197
      %p199 = scmp.le.s32.totalorder 1, %s18
      %p200 = scmp.lt.s32.totalorder %s18, 5
      %p201 = pnand %p199, %p200
      %p202 = pneg %p201
      // Predicated region
      $region9: #{decoder_forward.1} parent=5 // pred_check
        _
      $region10: #{decoder_forward.1} parent=5 // pred_check_branch
        %204 = sbr.rel (%p201) target = $region12
      $region11: #{decoder_forward.1} parent=5 // pred_region
        %s205 = ssub.s32 %s18, 1
        // Predicated region
        $region13: #{decoder_forward.1} parent=11 // pred_check
          %p206 = pneg %p39
        $region14: #{decoder_forward.1} parent=11 // pred_check_branch
          %208 = sbr.rel (%p206) target = $region16
        $region15: #{decoder_forward.1} parent=11 // pred_region
          _
        $region16: #{decoder_forward.1} parent=11 // pred_fallthru
          _
        // Predicated region
        $region17: #{decoder_forward.1} parent=11 // pred_check
          %p209 = pneg %p60
        $region18: #{decoder_forward.1} parent=11 // pred_check_branch
          %211 = sbr.rel (%p209) target = $region20
        $region19: #{decoder_forward.1} parent=11 // pred_region
          %213 = vsyncadd [#allocation7], 0
          %s214 = sshll.u32 %s1, 4
          %s215 = int_to_ptr.hbm [resolvable:$true] %s214
          %s216 = sshll.u32 [#allocation6], 4
          %s217 = int_to_ptr.vmem [resolvable:$true] %s216
          %222 = dma.hbm_to_vmem [thread:$0]  %s215, 256, %s217, [#allocation7], 64, 64, 4
        $region20: #{decoder_forward.1} parent=11 // pred_fallthru
          _
        // Predicated region
        $region21: #{decoder_forward.1} parent=11 // pred_check
          %p223 = pneg %p81
        $region22: #{decoder_forward.1} parent=11 // pred_check_branch
          %225 = sbr.rel (%p223) target = $region24
        $region23: #{decoder_forward.1} parent=11 // pred_region
          _
        $region24: #{decoder_forward.1} parent=11 // pred_fallthru
          _
        // Predicated region
        $region25: #{decoder_forward.1} parent=11 // pred_check
          %p226 = pneg %p102
        $region26: #{decoder_forward.1} parent=11 // pred_check_branch
          %228 = sbr.rel (%p226) target = $region28
        $region27: #{decoder_forward.1} parent=11 // pred_region
          _
        $region28: #{decoder_forward.1} parent=11 // pred_fallthru
          _
        // Predicated region
        $region29: #{decoder_forward.1} parent=11 // pred_check
          %p229 = pneg %p123
        $region30: #{decoder_forward.1} parent=11 // pred_check_branch
          %231 = sbr.rel (%p229) target = $region32
        $region31: #{decoder_forward.1} parent=11 // pred_region
          _
        $region32: #{decoder_forward.1} parent=11 // pred_fallthru
          _
        // Predicated region
        $region33: #{decoder_forward.1} parent=11 // pred_check
          %p232 = pneg %p144
        $region34: #{decoder_forward.1} parent=11 // pred_check_branch
          %234 = sbr.rel (%p232) target = $region36
        $region35: #{decoder_forward.1} parent=11 // pred_region
          _
        $region36: #{decoder_forward.1} parent=11 // pred_fallthru
          _
      $region12: #{decoder_forward.1} parent=5 // pred_fallthru
        _
      %p235 = scmp.lt.s32.totalorder %s18, 4
      // Predicated region
      $region37: #{decoder_forward.1} parent=5 // pred_check
        %p236 = pneg %p235
      $region38: #{decoder_forward.1} parent=5 // pred_check_branch
        %238 = sbr.rel (%p236) target = $region40
      $region39: #{decoder_forward.1} parent=5 // pred_region
        // Predicated region
        $region41: #{decoder_forward.1} parent=39 // pred_check
          %p239 = pneg %p164
        $region42: #{decoder_forward.1} parent=39 // pred_check_branch
          %241 = sbr.rel (%p239) target = $region44
        $region43: #{decoder_forward.1} parent=39 // pred_region
          %s242 = sand.u32 %s154, 1
          %s243 = scalar_lea.sflag [#allocation10], %s242
          %s244 = sand.u32 %s154, 1
          %s245 = smul.addr %s244, 16
          %s246 = scalar_lea.vmem [#allocation9], %s245
          %248 = vsyncadd %s243, 0
          %s249 = smul.addr %s18, 4
          %s250 = scalar_lea.hbm %s6, %s249
          %s251 = sshll.u32 %s250, 4
          %s252 = int_to_ptr.hbm [resolvable:$true] %s251
          %s253 = sshll.u32 %s246, 4
          %s254 = int_to_ptr.vmem [resolvable:$true] %s253
          %259 = dma.hbm_to_vmem [thread:$0]  %s252, 256, %s254, %s243, 256, 64, 4
        $region44: #{decoder_forward.1} parent=39 // pred_fallthru
          _
      $region40: #{decoder_forward.1} parent=5 // pred_fallthru
        _
      %p260 = scmp.le.s32.totalorder 1, %s18
      %p261 = scmp.lt.s32.totalorder %s18, 5
      %p262 = pnand %p260, %p261
      %p263 = pneg %p262
      // Predicated region
      $region45: #{decoder_forward.1} parent=5 // pred_check
        _
      $region46: #{decoder_forward.1} parent=5 // pred_check_branch
        %265 = sbr.rel (%p262) target = $region48
      $region47: #{decoder_forward.1} parent=5 // pred_region
        %s266 = ssub.s32 %s18, 1
        // Predicated region
        $region49: #{decoder_forward.1} parent=47 // pred_check
          %p267 = pneg %p60
        $region50: #{decoder_forward.1} parent=47 // pred_check_branch
          %269 = sbr.rel (%p267) target = $region52
        $region51: #{decoder_forward.1} parent=47 // pred_region
          %271 = dma.done [#allocation7], 256
        $region52: #{decoder_forward.1} parent=47 // pred_fallthru
          _
        %s272 = sand.u32 %s157, 1
        %s273 = scalar_lea.sflag [#allocation10], %s272
        %s274 = sand.u32 %s157, 1
        %s275 = smul.addr %s274, 16
        %s276 = scalar_lea.vmem [#allocation9], %s275
        // Predicated region
        $region53: #{decoder_forward.1} parent=47 // pred_check
          %p277 = pneg %p170
        $region54: #{decoder_forward.1} parent=47 // pred_check_branch
          %279 = sbr.rel (%p277) target = $region56
        $region55: #{decoder_forward.1} parent=47 // pred_region
          %281 = dma.done %s273, 256
        $region56: #{decoder_forward.1} parent=47 // pred_fallthru
          _
        %p282 = pneg %p39
        %p283 = pneg %p36
        %p284 = pneg %p60
        %p285 = pneg %p57
        %p286 = pneg %p81
        %p287 = pneg %p78
        %p288 = pneg %p102
        %p289 = pneg %p99
        %p290 = pneg %p123
        %p291 = pneg %p120
        %p292 = pneg %p144
        %p293 = pneg %p141
        %s294 = sand.u32 %s157, 1
        %s295 = scalar_lea.sflag [#allocation10], %s294
        %s296 = sand.u32 %s157, 1
        %s297 = smul.addr %s296, 16
        %s298 = scalar_lea.vmem [#allocation9], %s297
        %p299 = pneg %p170
        %p300 = pneg %p167
        %p301 = pneg %p191
        %p302 = pneg %p188
        %p304 = scmp.eq.s32.totalorder %s23, 0
        // Predicated region
        $region57: #{decoder_forward.1} parent=47 // pred_check
          %p305 = pneg %p304
        $region58: #{decoder_forward.1} parent=47 // pred_check_branch
          %307 = sbr.rel (%p305) target = $region60
        $region59: #{decoder_forward.1} parent=47 // pred_region
          %v308 = vld [vmem:[%s0] sm:$0x1]
          %v309 = vmul.f32 %v308, 0.5
          %v310 = vmul.f32 %v308, 0.70710677
          %v311 = vmul.f32 %v310, %v310
          %v312 = vmin.f32 16.0, %v311
          %v313 = vmul.f32 %v312, 2.1237322e-06
          %v314 = vadd.f32 %v313, 0.00028619796
          %v315 = vmul.f32 %v312, %v314
          %v316 = vadd.f32 %v315, 0.0036580483
          %v317 = vmul.f32 %v312, %v316
          %v318 = vadd.f32 %v317, 0.05243302
          %v319 = vmul.f32 %v312, %v318
          %v320 = vadd.f32 %v319, 0.18741608
          %v321 = vmul.f32 %v312, %v320
          %v322 = vadd.f32 %v321, 1.1283791
          %v323 = vmul.f32 %v310, %v322
          %v324 = vmul.f32 %v312, 3.8918573e-05
          %v325 = vadd.f32 %v324, 0.001143296
          %v326 = vmul.f32 %v312, %v325
          %v327 = vadd.f32 %v326, 0.014752088
          %v328 = vmul.f32 %v312, %v327
          %v329 = vadd.f32 %v328, 0.112945676
          %v330 = vmul.f32 %v312, %v329
          %v331 = vadd.f32 %v330, 0.4994258
          %v332 = vmul.f32 %v312, %v331
          %v333 = vadd.f32 %v332, 1.0
          %v334 = vrcp.pop %v333
          %v335 = vmul.f32 %v333, %v334
          %v336 = vsub.f32 1.0, %v335
          %v337 = vmul.f32 %v334, %v336
          %v338 = vadd.f32 %v334, %v337
          %vm339 = vweird.f32 %v333
          %vm340 = vweird.f32 %v334
          %vm341 = vmor %vm339, %vm340
          %v342 = vsel %vm341, %v334, %v338
          %v343 = vand.u32 2147483647, %v333
          %vm344 = vcmp.eq.f32.partialorder %v343, 8.507059e+37
          %v345 = vand.u32 %v333, 2147483648
          %v346 = vor.u32 1.1754944e-38, %v345
          %v347 = vsel %vm344, %v346, %v342
          %v348 = vmul.f32 %v323, %v347
          %v349 = vmin.f32 %v348, 1.0
          %v350 = vmax.f32 %v349, -1.0
          %v351 = vadd.f32 %v350, 1.0
          %v352 = vmul.f32 %v309, %v351
          %v353 = vpack.c.bf16 %v352, %v352
          %v354 = vld [vmem:[#allocation6] sm:$0xf]
          %v355 = vld [vmem:[#allocation6 + $0x4] sm:$0xf]
          %v356 = vld [vmem:[#allocation6 + $0x8] sm:$0xf]
          %v357 = vld [vmem:[#allocation6 + $0xc] sm:$0xf]
          %v358 = vld [vmem:[%s2] sm:$0x1]
          %v363 = vunpack.c.l.b16 %v354
          %v364 = vunpack.c.l.b16 %v355
          %v365 = vunpack.c.l.b16 %v356
          %v366 = vunpack.c.l.b16 %v357
          %v367 = vpack.c.b16 %v364, %v363
          %v368 = vpack.c.b16 %v366, %v365
          %vm371 = vcmask 261120
          %v373 = vsel %vm371, %v353, 0
          %375 = vmatpush.bf16.msra.mxu0 0
          %376 = vmatpush.bf16.msra.mxu0 0
          %377 = vmatpush.bf16.msra.mxu0 0
          %378 = vmatpush.bf16.msra.mxu0 0
          %379 = vmatpush.bf16.msra.mxu0 0
          %380 = vmatpush.bf16.msra.mxu0 0
          %381 = vmatpush.bf16.msra.mxu0 %v368
          %382 = vmatpush.bf16.msra.mxu0 %v367
          %383 = vmatmul.bf16.gmra.mxu0 %v373
          %v384 = vpop.f32.mrf.mxu0
          %v385 = vadd.f32 %v358, %v384
          %v386 = vpop.f32.mrf.mxu0
          %387 = vdwg.mxu0
          %vm388 = vcmask 253952
          %v389 = vsel %vm388, %v385, 0.0
          %390 = vadd.xlane.f32.xlu0 %v389
          %v391 = vpop.xlane.xlu0 %390
          %v392 = vrcp.pop 32.0
          %v393 = vmul.f32 32.0, %v392
          %v394 = vsub.f32 1.0, %v393
          %v395 = vmul.f32 %v392, %v394
          %v396 = vadd.f32 %v392, %v395
          %vm397 = vweird.f32 %v392
          %v398 = vsel %vm397, %v392, %v396
          %v399 = vmul.f32 %v391, %v398
          %v400 = vsub.f32 %v385, %v399
          %v401 = vmul.f32 %v400, %v400
          %v402 = vsel %vm388, %v401, 0.0
          %403 = vadd.xlane.f32.xlu0 %v402
          %v404 = vpop.xlane.xlu0 %403
          %v405 = vmul.f32 %v404, %v398
          %v406 = vadd.f32 %v405, 1e-05
          %v407 = vrsqrt.pop %v406
          %v408 = vmul.f32 %v407, %v406
          %v409 = vmul.f32 %v408, %v407
          %v410 = vmul.f32 0.5, %v409
          %v411 = vsub.f32 1.5, %v410
          %v412 = vmul.f32 %v407, %v411
          %vm413 = vweird.f32 %v406
          %vm414 = vweird.f32 %v407
          %vm415 = vmor %vm413, %vm414
          %v416 = vsel %vm415, %v407, %v412
          %v417 = vmul.f32 %v400, %v416
          %v418 = vld [vmem:[%s3] sm:$0x1]
          %v419 = vmul.f32 %v417, %v418
          %v420 = vld [vmem:[%s4] sm:$0x1]
          %v421 = vadd.f32 %v419, %v420
          %422 = vst.msk [vmem:[#allocation2] sm:$0x1] %vm388, %v421
          %vm423 = vcmask 0
          %424 = vst.msk [vmem:[#allocation3] sm:$0x1] %vm423, -inf
          %425 = vst.msk [vmem:[#allocation4] sm:$0x1] %vm423, 0.0
          %426 = vst.msk [vmem:[#allocation5] sm:$0x1] %vm423, 0.0
        $region60: #{decoder_forward.1} parent=47 // pred_fallthru
          _
        %v427 = vld [vmem:[#allocation2] sm:$0x1]
        %v428 = vpack.c.bf16 %v427, %v427
        %v429 = vld [vmem:[%s276] sm:$0xf]
        %v430 = vld [vmem:[%s276 + $0x4] sm:$0xf]
        %v431 = vld [vmem:[%s276 + $0x8] sm:$0xf]
        %v432 = vld [vmem:[%s276 + $0xc] sm:$0xf]
        %v437 = vunpack.c.l.b16 %v429
        %v438 = vunpack.c.l.b16 %v430
        %v439 = vunpack.c.l.b16 %v431
        %v440 = vunpack.c.l.b16 %v432
        %v441 = vpack.c.b16 %v438, %v437
        %v442 = vpack.c.b16 %v440, %v439
        %vm445 = vcmask 261120
        %v447 = vsel %vm445, %v428, 0
        %449 = vmatpush.bf16.msra.mxu0 0
        %450 = vmatpush.bf16.msra.mxu0 0
        %451 = vmatpush.bf16.msra.mxu0 0
        %452 = vmatpush.bf16.msra.mxu0 0
        %453 = vmatpush.bf16.msra.mxu0 0
        %454 = vmatpush.bf16.msra.mxu0 0
        %455 = vmatpush.bf16.msra.mxu0 %v442
        %456 = vmatpush.bf16.msra.mxu0 %v441
        %457 = vmatmul.bf16.gmra.mxu0 %v447
        %v458 = vpop.f32.mrf.mxu0
        %v459 = vadd.f32 0.0, %v458
        %v460 = vpop.f32.mrf.mxu0
        %461 = vdwg.mxu0
        %vm462 = vcmask 1040384
        %v463 = vsel %vm462, %v459, -inf
        %464 = vmax.xlane.f32.xlu0 %v463
        %v465 = vpop.xlane.xlu0 %464
        %v466 = vld [vmem:[#allocation3] sm:$0x1]
        %v467 = vmax.f32 %v466, %v465
        %v468 = vld [vmem:[#allocation4] sm:$0x1]
        %v469 = vsub.f32 %v466, %v467
        %v470 = vmul.f32 %v469, 1.442695
        %v471 = vpow.pop %v470
        %v472 = vmul.f32 %v468, %v471
        %474 = vset.pattern.permute.xlu0 0
        %475 = vperm.xlu0 %474, %v467
        %v476 = vpop.permute.xlu0 %475
        %v478 = vperm.slane %v476, 0
        %v479 = vsub.f32 %v459, %v478
        %v480 = vmul.f32 %v479, 1.442695
        %v481 = vpow.pop %v480
        %v482 = vsel %vm462, %v481, 0.0
        %483 = vadd.xlane.f32.xlu0 %v482
        %v484 = vpop.xlane.xlu0 %483
        %v485 = vadd.f32 %v472, %v484
        %vm486 = vcmask 0
        %487 = vst.msk [vmem:[#allocation4] sm:$0x1] %vm486, %v485
        %488 = vst.msk [vmem:[#allocation3] sm:$0x1] %vm486, %v467
        %v489 = vld [vmem:[%s5] sm:$0xff]
        %v490 = vlaneseq
        %v491 = vand.u32 %v490, 127
        %s492 = smul.u32 %s23, 128
        %v493 = vstv %s492
        %v494 = vadd.s32 %v491, %v493
        %vm495 = vcmp.ne.s32.totalorder %v489, 4294967196
        %496 = vset.pattern.permute.xlu0 0
        %497 = vperm.xlu0 %496, %v489
        %v498 = vpop.permute.xlu0 %497
        %vm499 = vcmp.eq.s32.totalorder %v494, %v498
        %v500 = vsel %vm495, 1, 0
        %501 = vset.pattern.permute.xlu0 0
        %502 = vperm.xlu0 %501, %v500
        %v503 = vpop.permute.xlu0 %502
        %vm504 = vcmp.eq.s32.totalorder %v503, 1
        %vm505 = vmand %vm499, %vm504
        %v506 = vld [vmem:[#allocation5] sm:$0x1]
        %v507 = vperm.slane %v459, 0
        %v508 = vsel %vm505, %v507, 0.0
        %509 = vadd.xlane.f32.xlu0 %v508
        %v510 = vpop.xlane.xlu0 %509
        %v511 = vrot.slane %v510, 4
        %v512 = vadd.f32 %v510, %v511
        %v513 = vrot.slane %v512, 2
        %v514 = vadd.f32 %v512, %v513
        %v515 = vrot.slane %v514, 1
        %v516 = vadd.f32 %v514, %v515
        %s517 = vtos %v516
        %v518 = vstv %s517
        %v519 = vadd.f32 %v506, %v518
        %520 = vst.msk [vmem:[#allocation5] sm:$0x1] %vm486, %v519
        %p521 = scmp.eq.s32.totalorder %s23, 3
        // Predicated region
        $region61: #{decoder_forward.1} parent=47 // pred_check
          %p522 = pneg %p521
        $region62: #{decoder_forward.1} parent=47 // pred_check_branch
          %524 = sbr.rel (%p522) target = $region64
        $region63: #{decoder_forward.1} parent=47 // pred_region
          %v525 = vcvt.s32.f32 %v500
          %vm526 = vcmask 7168
          %v527 = vsel %vm526, %v525, 0.0
          %528 = vadd.xlane.f32.xlu0 %v527
          %v529 = vpop.xlane.xlu0 %528
          %v530 = vrot.slane %v529, 4
          %v531 = vadd.f32 %v529, %v530
          %v532 = vrot.slane %v531, 2
          %v533 = vadd.f32 %v531, %v532
          %v534 = vrot.slane %v533, 1
          %v535 = vadd.f32 %v533, %v534
          %s536 = vtos %v535
          %v537 = vstv %s536
          %v538 = vld [vmem:[#allocation3] sm:$0x1]
          %v539 = vld [vmem:[#allocation4] sm:$0x1]
          %v540 = vlog2.pop %v539
          %v541 = vmul.f32 %v540, 0.6931472
          %v542 = vadd.f32 %v538, %v541
          %v543 = vmul.f32 %v537, %v542
          %v544 = vld [vmem:[#allocation5] sm:$0x1]
          %v545 = vsub.f32 %v543, %v544
          %v546 = vrcp.pop %v537
          %v547 = vmul.f32 %v537, %v546
          %v548 = vsub.f32 1.0, %v547
          %v549 = vmul.f32 %v546, %v548
          %v550 = vadd.f32 %v546, %v549
          %vm551 = vweird.f32 %v537
          %vm552 = vweird.f32 %v546
          %vm553 = vmor %vm551, %vm552
          %v554 = vsel %vm553, %v546, %v550
          %v555 = vand.u32 2147483647, %v537
          %vm556 = vcmp.eq.f32.partialorder %v555, 8.507059e+37
          %v557 = vand.u32 %v537, 2147483648
          %v558 = vor.u32 1.1754944e-38, %v557
          %v559 = vsel %vm556, %v558, %v554
          %v560 = vmul.f32 %v545, %v559
          %561 = vst.msk [vmem:[#allocation11] sm:$0x1] %vm486, %v560
        $region64: #{decoder_forward.1} parent=47 // pred_fallthru
          _
        // Predicated region
        $region65: #{decoder_forward.1} parent=47 // pred_check
          %p562 = pneg %p188
        $region66: #{decoder_forward.1} parent=47 // pred_check_branch
          %564 = sbr.rel (%p562) target = $region68
        $region67: #{decoder_forward.1} parent=47 // pred_region
          %566 = vsyncadd [#allocation8], 0
          %s568 = sshll.u32 [#allocation11], 4
          %s569 = int_to_ptr.vmem [resolvable:$true] %s568
          %s570 = sshll.u32 %s7, 4
          %s571 = int_to_ptr.hbm [resolvable:$true] %s570
          %573 = dma.vmem_to_hbm [thread:$0]  %s569, 16, %s571, [#allocation8]
        $region68: #{decoder_forward.1} parent=47 // pred_fallthru
          _
        // Predicated region
        $region69: #{decoder_forward.1} parent=47 // pred_check
          %p574 = pneg %p188
        $region70: #{decoder_forward.1} parent=47 // pred_check_branch
          %576 = sbr.rel (%p574) target = $region72
        $region71: #{decoder_forward.1} parent=47 // pred_region
          %578 = dma.done [#allocation8], 16
        $region72: #{decoder_forward.1} parent=47 // pred_fallthru
          _
      $region48: #{decoder_forward.1} parent=5 // pred_fallthru
        _
      %p579 = scmp.le.s32.totalorder 2, %s18
      // Predicated region
      $region73: #{decoder_forward.1} parent=5 // pred_check
        %p580 = pneg %p579
      $region74: #{decoder_forward.1} parent=5 // pred_check_branch
        %582 = sbr.rel (%p580) target = $region76
      $region75: #{decoder_forward.1} parent=5 // pred_region
        %s583 = ssub.s32 %s18, 2
      $region76: #{decoder_forward.1} parent=5 // pred_fallthru
        _
    $region6: #{decoder_forward.1} parent=1 // loop_footer
      %s22 = sadd.s32 1, %s18
    $region7: #{decoder_forward.1} parent=1 // loop_footer_branch
      %17 = sbr.rel target = $region3
    $region8: #{decoder_forward.1} parent=1 // loop_exit
      _
    %584 = vsyncpa [#allocation7], 1
    %s585 = scalar_lea.sflag [#allocation7], 1
    %586 = vsyncpa %s585, 1
    %587 = vsyncpa [#allocation10], 1
    %s588 = scalar_lea.sflag [#allocation10], 1
    %589 = vsyncpa %s588, 1
    %590 = vsyncpa [#allocation8], 1
    %s591 = scalar_lea.sflag [#allocation8], 1
    %592 = vsyncpa %s591, 1

</llo_original>
